<compile_context>
chip_gen: v5e
topology: v5e:2x2
jax: 0.10.0
libtpu: 0.0.40
codegen_flags: <defaults>
</compile_context>

<pallas_src>
import math

import jax
import jax.numpy as jnp
import numpy as np
from jax.experimental import pallas as pl
from jax.experimental.pallas import tpu as pltpu

PHI = (1 + 5 ** 0.5) / 2
STABILITY = 0.99          # CORESAM_PARAMETERS['thresholds']['stability']
ENHANCEMENT_LEVEL = 0.3   # QuantumEnhancedLayer default
NUM_HARMONICS = 11        # len(CORESAM_PARAMETERS['harmonics'])
PATTERNS = 32             # CORESAM_PARAMETERS['dimensions']['patterns']

# out = y*(1-e) + (y*s + proj*(1-s))*e  =  alpha*y + beta*proj
_BETA = ENHANCEMENT_LEVEL * (1.0 - STABILITY)   # 0.003
_ALPHA = 1.0 - _BETA                            # 0.997


def _round_up(x: int, m: int) -> int:
    return ((x + m - 1) // m) * m


def _harmonic_basis(dim: int) -> np.ndarray:
    """Row-normalized harmonic cosine basis (H, projection_dim), matching
    QuantumCore.enhance_concept_vectors."""
    pd = min(dim, PATTERNS)
    t = np.arange(pd, dtype=np.float32)
    harmonics = [PHI ** n for n in range(NUM_HARMONICS)][:pd]
    rows = [np.cos(t * h * 2.0 * math.pi / pd) for h in harmonics]
    basis = np.stack(rows, axis=0).astype(np.float32)                       # (H, pd)
    basis = basis / (np.linalg.norm(basis, axis=1, keepdims=True) + 1e-12)  # F.normalize(dim=1)
    return basis


def _fold_matrix(dim: int) -> np.ndarray:
    """M (dim, dim) such that out = y @ M reproduces the enhancement + blend.

    Top-left pd x pd block: alpha*I + beta*(B^T B); identity elsewhere
    (columns beyond the projection subspace, and the pd < 2 degenerate case,
    pass through unchanged — matching the torch branches)."""
    pd = min(dim, PATTERNS)
    M = np.eye(dim, dtype=np.float32)
    if pd >= 2:
        basis = _harmonic_basis(dim)                    # (H, pd)
        P = basis.T @ basis                             # (pd, pd)
        M[:pd, :pd] = _ALPHA * np.eye(pd, dtype=np.float32) + _BETA * P
    return M


def _choose_pack(dim: int) -> int:
    """How many feature rows to pack along lanes so the GEMM is lane-dense."""
    if dim >= 128:
        return 1
    for lanes in (256, 128):          # 256 matches the v6e/v7x MXU depth; 128 for odd dims
        if lanes % dim == 0:
            return lanes // dim
    return 1


def fold_and_pack_params(w, b):
    """Hoisted, once-per-model-init parameter prep (perf review item).

    w: (D, D) in `x @ w` convention, b: (1, D) or (D,).
    Returns folded weights plus the kron-block-diagonal lane-packed variants.
    """
    D = w.shape[0]
    pack = _choose_pack(D)
    M = jnp.asarray(_fold_matrix(D))
    w_eff = w.astype(jnp.float32) @ M                               # (D, D)
    b_eff = b.reshape(1, D).astype(jnp.float32) @ M                 # (1, D)
    if pack > 1:
        w_pack = jnp.kron(jnp.eye(pack, dtype=jnp.float32), w_eff)  # (D*pack, D*pack)
        b_pack = jnp.tile(b_eff, (1, pack))                         # (1, D*pack)
    else:
        w_pack, b_pack = w_eff, b_eff
    return {"dim": D, "pack": pack,
            "w_eff": w_eff, "b_eff": b_eff,
            "w_pack": w_pack, "b_pack": b_pack}


def _fused_linear_kernel(x_ref, w_ref, b_ref, o_ref):
    """Single GEMM per row-tile: o = x @ W_pack + b_pack.

    x_ref : (TILE, Wp)  lane-packed activations tile (double-buffered)
    w_ref : (Wp, Wp)    block-diagonal folded weight, VMEM-resident
    b_ref : (1, Wp)     folded bias, VMEM-resident
    o_ref : (TILE, Wp)
    """
    acc = jnp.dot(x_ref[...], w_ref[...], preferred_element_type=jnp.float32)
    o_ref[...] = (acc + b_ref[...]).astype(o_ref.dtype)


def quantum_enhanced_layer(x, params, *, tile_rows: int = 2048,
                           min_rows_for_pallas: int = 1024):
    """x: (B, S, D) float32, params from fold_and_pack_params -> (B, S, D)."""
    B, S, D = x.shape
    assert D == params["dim"], "params were prepared for a different hidden dim"
    N = B * S
    x2 = x.reshape(N, D).astype(jnp.float32)

    # Tiny inputs: per-call / per-step fixed costs dominate — let XLA fuse it.
    if N < min_rows_for_pallas:
        out2 = x2 @ params["w_eff"] + params["b_eff"]
        return out2.reshape(B, S, D)

    pack = params["pack"]
    Wp = D * pack

    # Pad rows so (N, D) -> (N/pack, Wp) is a pure row-major view and the
    # packed row count is a multiple of the 8-sublane tile.
    N_pad = _round_up(N, pack * 8)
    if N_pad != N:
        x2 = jnp.pad(x2, ((0, N_pad - N), (0, 0)))
    rows = N_pad // pack
    xp = x2.reshape(rows, Wp)

    # Row tiling: big lane-dense blocks; if everything fits in one tile, split
    # in two so v7x's second TensorCore still gets a grid step.
    tn = min(tile_rows, rows)
    if 8 < rows <= tile_rows:
        tn = max(8, _round_up(-(-rows // 2), 8))
    tn = _round_up(tn, 8)
    grid = (pl.cdiv(rows, tn),)

    # Explicit VMEM budget: 2x double-buffered in + 2x out blocks + resident
    # W_pack/b_pack + headroom; clamped well under v7x's 64 MiB physical VMEM.
    vmem_bytes = 4 * (4 * tn * Wp + Wp * Wp + Wp) + (2 << 20)
    vmem_bytes = int(min(max(vmem_bytes, 4 << 20), 48 << 20))

    cost = pl.CostEstimate(
        flops=2 * rows * Wp * Wp,
        transcendentals=0,
        bytes_accessed=4 * (2 * rows * Wp + Wp * Wp + Wp),
    )

    outp = pl.pallas_call(
        _fused_linear_kernel,
        out_shape=jax.ShapeDtypeStruct((rows, Wp), jnp.float32),
        grid_spec=pltpu.PrefetchScalarGridSpec(
            num_scalar_prefetch=0,
            grid=grid,
            in_specs=[
                pl.BlockSpec((tn, Wp), lambda i: (i, 0)),   # packed x row-tile
                pl.BlockSpec((Wp, Wp), lambda i: (0, 0)),   # W_pack, resident
                pl.BlockSpec((1, Wp), lambda i: (0, 0)),    # b_pack, resident
            ],
            out_specs=pl.BlockSpec((tn, Wp), lambda i: (i, 0)),
        ),
        compiler_params=pltpu.CompilerParams(
            dimension_semantics=("parallel",),   # shard row-tiles across v7x's 2 TCs
            vmem_limit_bytes=vmem_bytes,
        ),
        cost_estimate=cost,
    )(xp, params["w_pack"], params["b_pack"])

    out2 = outp.reshape(N_pad, D)[:N]
    return out2.reshape(B, S, D)


def _reference(x, w, b):
    """Unfused reference: Linear -> enhance_concept_vectors -> blend."""
    B, S, D = x.shape
    pd = min(D, PATTERNS)
    y = x.reshape(-1, D) @ w + b.reshape(1, D)
    if pd >= 2:
        basis = jnp.asarray(_harmonic_basis(D))
        sub = y[:, :pd]
        proj = (sub @ basis.T) @ basis
        enhanced_sub = sub * STABILITY + proj * (1.0 - STABILITY)
        enhanced = jnp.concatenate([enhanced_sub, y[:, pd:]], axis=1)
    else:
        enhanced = y
    out = y * (1.0 - ENHANCEMENT_LEVEL) + enhanced * ENHANCEMENT_LEVEL
    return out.reshape(B, S, D)


if __name__ == "__main__":
    # Small shapes consistent with the module: batch=2, seq=8, hidden=32.
    Bt, St, Dh = 2, 8, 32
    key = jax.random.PRNGKey(0)
    kx, kw, kb, kx2 = jax.random.split(key, 4)

    # Deterministic nn.Linear(Dh, Dh)-style init (uniform in +/- 1/sqrt(Dh)).
    bound = 1.0 / math.sqrt(Dh)
    w = jax.random.uniform(kw, (Dh, Dh), minval=-bound, maxval=bound, dtype=jnp.float32)
    b = jax.random.uniform(kb, (1, Dh), minval=-bound, maxval=bound, dtype=jnp.float32)

    # Fold + lane-pack once (hoisted out of the per-call path).
    params = fold_and_pack_params(w, b)

    # 1) Small module-sized input, forced through the Pallas path.
    x_small = jax.random.normal(kx, (Bt, St, Dh), dtype=jnp.float32)
    out_small = jax.block_until_ready(
        quantum_enhanced_layer(x_small, params, min_rows_for_pallas=0))
    ref_small = _reference(x_small, w, b)
    assert np.allclose(np.asarray(out_small), np.asarray(ref_small),
                       atol=1e-4, rtol=1e-4), "kernel/reference mismatch (small)"

    # 2) Moderate input exercising multi-step grid + partial last tile.
    x_med = jax.random.normal(kx2, (2, 2052, Dh), dtype=jnp.float32)
    out_med = jax.block_until_ready(
        quantum_enhanced_layer(x_med, params, tile_rows=256))
    ref_med = _reference(x_med, w, b)
    assert np.allclose(np.asarray(out_med), np.asarray(ref_med),
                       atol=1e-4, rtol=1e-4), "kernel/reference mismatch (medium)"

    # TODO(synk): QuantumCore.apply_resonance's rFFT/irFFT filtering path (and the
    # gradient-hook evolution acceleration) have no clean Pallas equivalent and are
    # not part of this inference-forward interpretation.
    print("KERNEL_OK")
</pallas_src>

<mosaic_0001>
module attributes {stable_mosaic.version = 11 : i64} {
  func.func @_fused_linear_kernel(%arg0: i32, %arg1: memref<8x256xf32, #tpu.memory_space<vmem>>, %arg2: memref<256x256xf32, #tpu.memory_space<vmem>>, %arg3: memref<1x256xf32, #tpu.memory_space<vmem>>, %arg4: memref<8x256xf32, #tpu.memory_space<vmem>>) attributes {dimension_semantics = [#tpu.dimension_semantics<parallel>], iteration_bounds = array<i64: 1>, scalar_prefetch = 0 : i64, scratch_operands = 0 : i64, tpu.core_type = #tpu.core_type<tc>, window_params = [{transform_indices = @transform_0, window_bounds = array<i64: 8, 256>}, {pipeline_mode = #tpu.pipeline_mode<synchronous>, transform_indices = @transform_1, window_bounds = array<i64: 256, 256>}, {pipeline_mode = #tpu.pipeline_mode<synchronous>, transform_indices = @transform_2, window_bounds = array<i64: 1, 256>}, {transform_indices = @transform_3, window_bounds = array<i64: 8, 256>}]} {
    %c0 = arith.constant 0 : index
    %c0_0 = arith.constant 0 : index
    %0 = vector.load %arg1[%c0, %c0_0] : memref<8x256xf32, #tpu.memory_space<vmem>>, vector<8x256xf32>
    %c0_1 = arith.constant 0 : index
    %c0_2 = arith.constant 0 : index
    %1 = vector.load %arg2[%c0_1, %c0_2] : memref<256x256xf32, #tpu.memory_space<vmem>>, vector<256x256xf32>
    %cst = arith.constant dense<0.000000e+00> : vector<8x256xf32>
    %2 = tpu.matmul %0, %1, %cst {dimension_numbers = #tpu.dot_dimension_numbers<[1], [0], [0], [1], [0, 0, 1, 1], [], []>} : vector<8x256xf32>, vector<256x256xf32>, vector<8x256xf32> -> vector<8x256xf32>
    %c0_3 = arith.constant 0 : index
    %c0_4 = arith.constant 0 : index
    %3 = vector.load %arg3[%c0_3, %c0_4] : memref<1x256xf32, #tpu.memory_space<vmem>>, vector<1x256xf32>
    %4 = vector.broadcast %3 : vector<1x256xf32> to vector<8x256xf32>
    %5 = arith.addf %2, %4 : vector<8x256xf32>
    %c0_5 = arith.constant 0 : index
    %c0_6 = arith.constant 0 : index
    %6 = vector.load %arg4[%c0_5, %c0_6] : memref<8x256xf32, #tpu.memory_space<vmem>>, vector<8x256xf32>
    tpu.vector_store %arg4[%c0_5, %c0_6], %5 {strides = array<i32>} : memref<8x256xf32, #tpu.memory_space<vmem>>, vector<8x256xf32>,
    return
  }
  func.func @transform_0(%arg0: i32) -> (i32, i32) {
    %c0_i32 = arith.constant 0 : i32
    %c0_i32_0 = arith.constant 0 : i32
    return %arg0, %c0_i32 : i32, i32
  }
  func.func @transform_1(%arg0: i32) -> (i32, i32) {
    %c0_i32 = arith.constant 0 : i32
    %c0_i32_0 = arith.constant 0 : i32
    %c0_i32_1 = arith.constant 0 : i32
    return %c0_i32, %c0_i32_0 : i32, i32
  }
  func.func @transform_2(%arg0: i32) -> (i32, i32) {
    %c0_i32 = arith.constant 0 : i32
    %c0_i32_0 = arith.constant 0 : i32
    %c0_i32_1 = arith.constant 0 : i32
    return %c0_i32, %c0_i32_0 : i32, i32
  }
  func.func @transform_3(%arg0: i32) -> (i32, i32) {
    %c0_i32 = arith.constant 0 : i32
    %c0_i32_0 = arith.constant 0 : i32
    return %arg0, %c0_i32 : i32, i32
  }
}

</mosaic_0001>

<llo_original>
// kernel: tpu_custom_call.1
$region0: #{tpu_custom_call.1}
  #allocation0 [shape = 'u32[]', space=smem, size = 0x4, offset = 0x4, fixed_abs, tag = 'smem constant byte address 0x4 - core index']
  #allocation1 [shape = 'u32[72,128]{1,0:T(1,128)}', space=vmem, size = 0x9000, scoped, tag = 'internal scratch']
  %s0 = inlined_call_operand.hbm [shape: f32[8,256], index: 0, kind: input, shape index: {}]
  %s1 = inlined_call_operand.hbm [shape: f32[256,256], index: 1, kind: input, shape index: {}]
  %s2 = inlined_call_operand.hbm [shape: f32[1,256], index: 2, kind: input, shape index: {}]
  %s3 = inlined_call_operand.hbm [shape: f32[8,256], index: 3, kind: output, shape index: {}]
  %s4 = sld [smem:[#allocation0]]
  $region34: #{tpu_custom_call.1} parent=0
    _
  %s6 = ssub.s32 1, %s4
  %s7 = scalar_select 0, %s6, %s4
  $region1: #{tpu_custom_call.1} parent=0
    #allocation2 [shape = 'u8[8192]{0}', space=vmem, size = 0x2000, scoped, tag = 'input window, operand 0, single buffered']
    #allocation3 [shape = 's32[1]{0}', space=sflag, size = 0x4, scoped, tag = 'scoped memory for tpu_custom_call.1']
    #allocation4 [shape = 's32[1]{0}', space=sflag, size = 0x4, scoped, tag = 'scoped memory for tpu_custom_call.1']
    #allocation5 [shape = 'u8[262144]{0}', space=vmem, size = 0x40000, scoped, tag = 'input window, operand 1, single buffered']
    #allocation6 [shape = 's32[1]{0}', space=sflag, size = 0x4, scoped, tag = 'scoped memory for tpu_custom_call.1']
    #allocation7 [shape = 'u8[1024]{0}', space=vmem, size = 0x400, scoped, tag = 'input window, operand 2, single buffered']
    #allocation8 [shape = 'u8[8192]{0}', space=vmem, size = 0x2000, scoped, tag = 'output window, operand 0, single buffered']
    %8 = vsyncpa [#allocation3], 0
    %9 = vsyncpa [#allocation6], 0
    %10 = vsyncpa [#allocation4], 0
    // Predicated region
    $region2: #{tpu_custom_call.1} parent=1 // pred_check
      _
    $region3: #{tpu_custom_call.1} parent=1 // pred_check_branch
      %12 = sbr.rel (0) target = $region5
    $region4: #{tpu_custom_call.1} parent=1 // pred_region
      %14 = vsyncadd [#allocation3], 0
      %s16 = sshll.u32 %s0, 4
      %s17 = int_to_ptr.hbm [resolvable:$true] %s16
      %s18 = sshll.u32 [#allocation2], 4
      %s19 = int_to_ptr.vmem [resolvable:$true] %s18
      %21 = dma.hbm_to_vmem [thread:$0]  %s17, 256, %s19, [#allocation3]
    $region5: #{tpu_custom_call.1} parent=1 // pred_fallthru
      _
    // Predicated region
    $region6: #{tpu_custom_call.1} parent=1 // pred_check
      _
    $region7: #{tpu_custom_call.1} parent=1 // pred_check_branch
      %23 = sbr.rel (0) target = $region9
    $region8: #{tpu_custom_call.1} parent=1 // pred_region
      %25 = vsyncadd [#allocation6], 0
      %s26 = sshll.u32 %s1, 4
      %s27 = int_to_ptr.hbm [resolvable:$true] %s26
      %s28 = sshll.u32 [#allocation5], 4
      %s29 = int_to_ptr.vmem [resolvable:$true] %s28
      %34 = dma.hbm_to_vmem [thread:$0]  %s27, 8192, %s29, [#allocation6], 256, 256, 16
    $region9: #{tpu_custom_call.1} parent=1 // pred_fallthru
      _
    // Predicated region
    $region10: #{tpu_custom_call.1} parent=1 // pred_check
      _
    $region11: #{tpu_custom_call.1} parent=1 // pred_check_branch
      %36 = sbr.rel (0) target = $region13
    $region12: #{tpu_custom_call.1} parent=1 // pred_region
      %38 = vsyncadd [#allocation6], 0
      %s40 = sshll.u32 %s2, 4
      %s41 = int_to_ptr.hbm [resolvable:$true] %s40
      %s42 = sshll.u32 [#allocation7], 4
      %s43 = int_to_ptr.vmem [resolvable:$true] %s42
      %45 = dma.hbm_to_vmem [thread:$0]  %s41, 32, %s43, [#allocation6]
    $region13: #{tpu_custom_call.1} parent=1 // pred_fallthru
      _
    // Predicated region
    $region14: #{tpu_custom_call.1} parent=1 // pred_check
      _
    $region15: #{tpu_custom_call.1} parent=1 // pred_check_branch
      %47 = sbr.rel (0) target = $region17
    $region16: #{tpu_custom_call.1} parent=1 // pred_region
      %49 = dma.done [#allocation3], 256
    $region17: #{tpu_custom_call.1} parent=1 // pred_fallthru
      _
    // Predicated region
    $region18: #{tpu_custom_call.1} parent=1 // pred_check
      _
    $region19: #{tpu_custom_call.1} parent=1 // pred_check_branch
      %51 = sbr.rel (0) target = $region21
    $region20: #{tpu_custom_call.1} parent=1 // pred_region
      %53 = dma.done [#allocation6], 8192
    $region21: #{tpu_custom_call.1} parent=1 // pred_fallthru
      _
    // Predicated region
    $region22: #{tpu_custom_call.1} parent=1 // pred_check
      _
    $region23: #{tpu_custom_call.1} parent=1 // pred_check_branch
      %55 = sbr.rel (0) target = $region25
    $region24: #{tpu_custom_call.1} parent=1 // pred_region
      %57 = dma.done [#allocation6], 32
    $region25: #{tpu_custom_call.1} parent=1 // pred_fallthru
      _
    %v58 = vld [vmem:[#allocation2] sm:$0xff]
    %v59 = vld [vmem:[#allocation2 + $0x8] sm:$0xff]
    %v60 = vld [vmem:[#allocation5] sm:$0xff]
    %v61 = vld [vmem:[#allocation5 + $0x8] sm:$0xff]
    %v62 = vld [vmem:[#allocation5 + $0x10] sm:$0xff]
    %v63 = vld [vmem:[#allocation5 + $0x18] sm:$0xff]
    %v64 = vld [vmem:[#allocation5 + $0x20] sm:$0xff]
    %v65 = vld [vmem:[#allocation5 + $0x28] sm:$0xff]
    %v66 = vld [vmem:[#allocation5 + $0x30] sm:$0xff]
    %v67 = vld [vmem:[#allocation5 + $0x38] sm:$0xff]
    %v68 = vld [vmem:[#allocation5 + $0x40] sm:$0xff]
    %v69 = vld [vmem:[#allocation5 + $0x48] sm:$0xff]
    %v70 = vld [vmem:[#allocation5 + $0x50] sm:$0xff]
    %v71 = vld [vmem:[#allocation5 + $0x58] sm:$0xff]
    %v72 = vld [vmem:[#allocation5 + $0x60] sm:$0xff]
    %v73 = vld [vmem:[#allocation5 + $0x68] sm:$0xff]
    %v74 = vld [vmem:[#allocation5 + $0x70] sm:$0xff]
    %v75 = vld [vmem:[#allocation5 + $0x78] sm:$0xff]
    %v76 = vld [vmem:[#allocation5 + $0x80] sm:$0xff]
    %v77 = vld [vmem:[#allocation5 + $0x88] sm:$0xff]
    %v78 = vld [vmem:[#allocation5 + $0x90] sm:$0xff]
    %v79 = vld [vmem:[#allocation5 + $0x98] sm:$0xff]
    %v80 = vld [vmem:[#allocation5 + $0xa0] sm:$0xff]
    %v81 = vld [vmem:[#allocation5 + $0xa8] sm:$0xff]
    %v82 = vld [vmem:[#allocation5 + $0xb0] sm:$0xff]
    %v83 = vld [vmem:[#allocation5 + $0xb8] sm:$0xff]
    %v84 = vld [vmem:[#allocation5 + $0xc0] sm:$0xff]
    %v85 = vld [vmem:[#allocation5 + $0xc8] sm:$0xff]
    %v86 = vld [vmem:[#allocation5 + $0xd0] sm:$0xff]
    %v87 = vld [vmem:[#allocation5 + $0xd8] sm:$0xff]
    %v88 = vld [vmem:[#allocation5 + $0xe0] sm:$0xff]
    %v89 = vld [vmem:[#allocation5 + $0xe8] sm:$0xff]
    %v90 = vld [vmem:[#allocation5 + $0xf0] sm:$0xff]
    %v91 = vld [vmem:[#allocation5 + $0xf8] sm:$0xff]
    %v92 = vld [vmem:[#allocation5 + $0x100] sm:$0xff]
    %v93 = vld [vmem:[#allocation5 + $0x108] sm:$0xff]
    %v94 = vld [vmem:[#allocation5 + $0x110] sm:$0xff]
    %v95 = vld [vmem:[#allocation5 + $0x118] sm:$0xff]
    %v96 = vld [vmem:[#allocation5 + $0x120] sm:$0xff]
    %v97 = vld [vmem:[#allocation5 + $0x128] sm:$0xff]
    %v98 = vld [vmem:[#allocation5 + $0x130] sm:$0xff]
    %v99 = vld [vmem:[#allocation5 + $0x138] sm:$0xff]
    %v100 = vld [vmem:[#allocation5 + $0x140] sm:$0xff]
    %v101 = vld [vmem:[#allocation5 + $0x148] sm:$0xff]
    %v102 = vld [vmem:[#allocation5 + $0x150] sm:$0xff]
    %v103 = vld [vmem:[#allocation5 + $0x158] sm:$0xff]
    %v104 = vld [vmem:[#allocation5 + $0x160] sm:$0xff]
    %v105 = vld [vmem:[#allocation5 + $0x168] sm:$0xff]
    %v106 = vld [vmem:[#allocation5 + $0x170] sm:$0xff]
    %v107 = vld [vmem:[#allocation5 + $0x178] sm:$0xff]
    %v108 = vld [vmem:[#allocation5 + $0x180] sm:$0xff]
    %v109 = vld [vmem:[#allocation5 + $0x188] sm:$0xff]
    %v110 = vld [vmem:[#allocation5 + $0x190] sm:$0xff]
    %v111 = vld [vmem:[#allocation5 + $0x198] sm:$0xff]
    %v112 = vld [vmem:[#allocation5 + $0x1a0] sm:$0xff]
    %v113 = vld [vmem:[#allocation5 + $0x1a8] sm:$0xff]
    %v114 = vld [vmem:[#allocation5 + $0x1b0] sm:$0xff]
    %v115 = vld [vmem:[#allocation5 + $0x1b8] sm:$0xff]
    %v116 = vld [vmem:[#allocation5 + $0x1c0] sm:$0xff]
    %v117 = vld [vmem:[#allocation5 + $0x1c8] sm:$0xff]
    %v118 = vld [vmem:[#allocation5 + $0x1d0] sm:$0xff]
    %v119 = vld [vmem:[#allocation5 + $0x1d8] sm:$0xff]
    %v120 = vld [vmem:[#allocation5 + $0x1e0] sm:$0xff]
    %v121 = vld [vmem:[#allocation5 + $0x1e8] sm:$0xff]
    %v122 = vld [vmem:[#allocation5 + $0x1f0] sm:$0xff]
    %v123 = vld [vmem:[#allocation5 + $0x1f8] sm:$0xff]
    %v124 = vld [vmem:[#allocation7] sm:$0x3]
    %v126 = vperm.slane %v124, 0
    %v127 = vperm.slane %v124, 1
    %130 = vmatpush.msra.mxu0 %v90
    %131 = vmatpush.msra.mxu0 %v88
    %132 = vmatpush.msra.mxu0 %v86
    %133 = vmatpush.msra.mxu0 %v84
    %134 = vmatpush.msra.mxu0 %v82
    %135 = vmatpush.msra.mxu0 %v80
    %136 = vmatpush.msra.mxu0 %v78
    %137 = vmatpush.msra.mxu0 %v76
    %138 = vmatpush.msra.mxu0 %v74
    %139 = vmatpush.msra.mxu0 %v72
    %140 = vmatpush.msra.mxu0 %v70
    %141 = vmatpush.msra.mxu0 %v68
    %142 = vmatpush.msra.mxu0 %v66
    %143 = vmatpush.msra.mxu0 %v64
    %144 = vmatpush.msra.mxu0 %v62
    %145 = vmatpush.msra.mxu0 %v60
    %146 = vmatmul.f32.gmra.mxu0 %v58
    %v147 = vpop.f32.mrf.mxu0
    %v148 = vadd.f32 %v126, %v147
    %149 = vdwg.mxu0
    %150 = vmatpush.msra.mxu0 %v122
    %151 = vmatpush.msra.mxu0 %v120
    %152 = vmatpush.msra.mxu0 %v118
    %153 = vmatpush.msra.mxu0 %v116
    %154 = vmatpush.msra.mxu0 %v114
    %155 = vmatpush.msra.mxu0 %v112
    %156 = vmatpush.msra.mxu0 %v110
    %157 = vmatpush.msra.mxu0 %v108
    %158 = vmatpush.msra.mxu0 %v106
    %159 = vmatpush.msra.mxu0 %v104
    %160 = vmatpush.msra.mxu0 %v102
    %161 = vmatpush.msra.mxu0 %v100
    %162 = vmatpush.msra.mxu0 %v98
    %163 = vmatpush.msra.mxu0 %v96
    %164 = vmatpush.msra.mxu0 %v94
    %165 = vmatpush.msra.mxu0 %v92
    %166 = vmatmul.f32.gmra.mxu0 %v59
    %v167 = vpop.f32.mrf.mxu0
    %v168 = vadd.f32 %v148, %v167
    %169 = vdwg.mxu0
    %170 = vmatpush.msra.mxu0 %v91
    %171 = vmatpush.msra.mxu0 %v89
    %172 = vmatpush.msra.mxu0 %v87
    %173 = vmatpush.msra.mxu0 %v85
    %174 = vmatpush.msra.mxu0 %v83
    %175 = vmatpush.msra.mxu0 %v81
    %176 = vmatpush.msra.mxu0 %v79
    %177 = vmatpush.msra.mxu0 %v77
    %178 = vmatpush.msra.mxu0 %v75
    %179 = vmatpush.msra.mxu0 %v73
    %180 = vmatpush.msra.mxu0 %v71
    %181 = vmatpush.msra.mxu0 %v69
    %182 = vmatpush.msra.mxu0 %v67
    %183 = vmatpush.msra.mxu0 %v65
    %184 = vmatpush.msra.mxu0 %v63
    %185 = vmatpush.msra.mxu0 %v61
    %186 = vmatmul.f32.gmra.mxu0 %v58
    %v187 = vpop.f32.mrf.mxu0
    %v188 = vadd.f32 %v127, %v187
    %189 = vdwg.mxu0
    %190 = vmatpush.msra.mxu0 %v123
    %191 = vmatpush.msra.mxu0 %v121
    %192 = vmatpush.msra.mxu0 %v119
    %193 = vmatpush.msra.mxu0 %v117
    %194 = vmatpush.msra.mxu0 %v115
    %195 = vmatpush.msra.mxu0 %v113
    %196 = vmatpush.msra.mxu0 %v111
    %197 = vmatpush.msra.mxu0 %v109
    %198 = vmatpush.msra.mxu0 %v107
    %199 = vmatpush.msra.mxu0 %v105
    %200 = vmatpush.msra.mxu0 %v103
    %201 = vmatpush.msra.mxu0 %v101
    %202 = vmatpush.msra.mxu0 %v99
    %203 = vmatpush.msra.mxu0 %v97
    %204 = vmatpush.msra.mxu0 %v95
    %205 = vmatpush.msra.mxu0 %v93
    %206 = vmatmul.f32.gmra.mxu0 %v59
    %v207 = vpop.f32.mrf.mxu0
    %v208 = vadd.f32 %v188, %v207
    %209 = vdwg.mxu0
    %210 = vst [vmem:[#allocation8] sm:$0xff] %v168
    %211 = vst [vmem:[#allocation8 + $0x8] sm:$0xff] %v208
    // Predicated region
    $region26: #{tpu_custom_call.1} parent=1 // pred_check
      _
    $region27: #{tpu_custom_call.1} parent=1 // pred_check_branch
      %213 = sbr.rel (0) target = $region29
    $region28: #{tpu_custom_call.1} parent=1 // pred_region
      %215 = vsyncadd [#allocation4], 0
      %s217 = sshll.u32 [#allocation8], 4
      %s218 = int_to_ptr.vmem [resolvable:$true] %s217
      %s219 = sshll.u32 %s3, 4
      %s220 = int_to_ptr.hbm [resolvable:$true] %s219
      %222 = dma.vmem_to_hbm [thread:$0]  %s218, 256, %s220, [#allocation4]
    $region29: #{tpu_custom_call.1} parent=1 // pred_fallthru
      _
    // Predicated region
    $region30: #{tpu_custom_call.1} parent=1 // pred_check
      _
    $region31: #{tpu_custom_call.1} parent=1 // pred_check_branch
      %224 = sbr.rel (0) target = $region33
    $region32: #{tpu_custom_call.1} parent=1 // pred_region
      %226 = dma.done [#allocation4], 256
    $region33: #{tpu_custom_call.1} parent=1 // pred_fallthru
      _
    %227 = vsyncpa [#allocation3], 1
    %228 = vsyncpa [#allocation6], 1
    %229 = vsyncpa [#allocation4], 1

</llo_original>
